<compile_context>
chip_gen: v5e
topology: v5e:2x2
jax: 0.10.0
libtpu: 0.0.40
codegen_flags: <defaults>
</compile_context>

<pallas_src>
import functools
import numpy as np
import jax
import jax.numpy as jnp
from jax.experimental import pallas as pl
from jax.experimental.pallas import tpu as pltpu


def _round_up(x, m):
    return ((x + m - 1) // m) * m


# ---------------------------------------------------------------------------
# Pallas kernel: (M, N, K)-tiled matmul, f32 accumulation in the output block,
# fused bias + (Leaky)ReLU epilogue on the last K step.
# ---------------------------------------------------------------------------
def _conv_mm_kernel(x_ref, w_ref, b_ref, o_ref, *, act, alpha):
    k = pl.program_id(2)

    @pl.when(k == 0)
    def _():
        o_ref[...] = jnp.zeros_like(o_ref)

    # bf16 x bf16 -> f32 accumulate (native MXU rate).
    o_ref[...] += jnp.dot(x_ref[...], w_ref[...],
                          preferred_element_type=jnp.float32)

    @pl.when(k == pl.num_programs(2) - 1)
    def _():
        y = o_ref[...] + b_ref[...]
        if act == "relu":
            y = jnp.maximum(y, 0.0)
        elif act == "leaky":
            y = jnp.where(y >= 0.0, y, alpha * y)
        o_ref[...] = y.astype(o_ref.dtype)


def _select_tiles(M, K, N):
    """Pick (Mp, Kp, Np, tm, tk, tn) respecting (8,128) tiling and VMEM."""
    Kp = _round_up(K, 128)
    Np = _round_up(N, 128)
    tn = 256 if Np % 256 == 0 else Np
    tm = 256 if M > 256 else _round_up(max(M, 1), 16)
    Mp = _round_up(M, tm)
    if Mp <= 256 and Kp <= 8192:
        tk = Kp                      # small-M layer: single K step (overhead-bound)
    elif Kp % 512 == 0:
        tk = 512
    elif Kp % 256 == 0:
        tk = 256
    else:
        tk = 128
    return Mp, Kp, Np, tm, tk, tn


def _matmul_bias_act(xp, wp, bp, tm, tk, tn, act, alpha=0.1):
    """xp: (Mp, Kp) bf16, wp: (Kp, Np) bf16, bp: (1, Np) f32 -> (Mp, Np) f32."""
    Mp, Kp = xp.shape
    _, Np = wp.shape
    kernel = functools.partial(_conv_mm_kernel, act=act, alpha=alpha)
    return pl.pallas_call(
        kernel,
        out_shape=jax.ShapeDtypeStruct((Mp, Np), jnp.float32),
        grid_spec=pltpu.PrefetchScalarGridSpec(
            num_scalar_prefetch=0,
            grid=(Mp // tm, Np // tn, Kp // tk),
            in_specs=[
                pl.BlockSpec((tm, tk), lambda i, j, k: (i, k)),
                pl.BlockSpec((tk, tn), lambda i, j, k: (k, j)),
                pl.BlockSpec((1, tn), lambda i, j, k: (0, j)),
            ],
            out_specs=pl.BlockSpec((tm, tn), lambda i, j, k: (i, j)),
        ),
        compiler_params=pltpu.CompilerParams(
            dimension_semantics=("parallel", "parallel", "arbitrary"),
            vmem_limit_bytes=48 * 1024 * 1024,
        ),
    )(xp, wp, bp)


# ---------------------------------------------------------------------------
# im2col glue (plain JAX: pad + strided slices + reshape)
# ---------------------------------------------------------------------------
def _im2col(x_nhwc, kh, kw, stride, pad):
    N, H, W, C = x_nhwc.shape
    xp = jnp.pad(x_nhwc, ((0, 0), (pad, pad), (pad, pad), (0, 0)))
    OH = (H + 2 * pad - kh) // stride + 1
    OW = (W + 2 * pad - kw) // stride + 1
    cols = []
    for i in range(kh):
        for j in range(kw):
            patch = jax.lax.slice(
                xp, (0, i, j, 0),
                (N, i + stride * (OH - 1) + 1, j + stride * (OW - 1) + 1, C),
                (1, stride, stride, 1))
            cols.append(patch)                     # (N, OH, OW, C)
    patches = jnp.stack(cols, axis=3)              # (N, OH, OW, KH*KW, C)
    return patches.reshape(N * OH * OW, kh * kw * C), (N, OH, OW)


def conv2d_act_pallas(x_nhwc, layer):
    """PyTorch Conv2d semantics (OIHW weight) + activation; GEMM in Pallas."""
    kh = kw = layer["ksize"]
    cols, (N, OH, OW) = _im2col(x_nhwc, kh, kw, layer["stride"], layer["pad"])
    M, K = cols.shape
    cout = layer["cout"]
    Mp, Kp, Np, tm, tk, tn = _select_tiles(M, K, cout)
    assert layer["wmat"].shape == (Kp, Np)
    xp = jnp.zeros((Mp, Kp), jnp.bfloat16).at[:M, :K].set(
        cols.astype(jnp.bfloat16))
    out = _matmul_bias_act(xp, layer["wmat"], layer["brow"], tm, tk, tn,
                           layer["act"], layer["alpha"])
    return out[:M, :cout].reshape(N, OH, OW, cout)


# ---------------------------------------------------------------------------
# Parameter setup (deterministic synthetic weights) + spectral normalization.
# GEMM operands (transposed / padded / bf16 weights, padded bias rows) are
# precomputed here, hoisted out of the forward pass.
# ---------------------------------------------------------------------------
def spectral_normalize(w_oihw, n_iter=30):
    # TODO(synk): PyTorch's spectral_norm keeps a persistent random `u` and
    # performs one power iteration per forward; here we run a converged power
    # method at parameter-setup time (same normalization semantics).
    cout = w_oihw.shape[0]
    wm = w_oihw.reshape(cout, -1)
    v = jnp.ones((wm.shape[1],), wm.dtype) / jnp.sqrt(float(wm.shape[1]))

    def body(_, v):
        u = wm @ v
        u = u / (jnp.linalg.norm(u) + 1e-12)
        v = wm.T @ u
        v = v / (jnp.linalg.norm(v) + 1e-12)
        return v

    v = jax.lax.fori_loop(0, n_iter, body, v)
    sigma = jnp.linalg.norm(wm @ v)
    return w_oihw / sigma


def init_nlayer_discriminator_params(key, input_nc, ndf=64, n_layers=3):
    kw = 4
    padw = 2  # int(ceil((4 - 1) / 2))
    # (cin, cout, stride, spectral_norm?, act, has_bias)
    cfgs = [(input_nc, ndf, 2, False, "relu", True)]
    nf = ndf
    for _ in range(1, n_layers):
        nf_prev, nf = nf, min(nf * 2, 512)
        cfgs.append((nf_prev, nf, 2, True, "leaky", False))   # bias=False
    nf_prev, nf = nf, min(nf * 2, 512)
    cfgs.append((nf_prev, nf, 1, True, "leaky", True))
    cfgs.append((nf, 1, 1, False, "none", True))

    layers = []
    for (cin, cout, stride, sn, act, has_bias) in cfgs:
        key, wk, bk = jax.random.split(key, 3)
        w = 0.02 * jax.random.normal(wk, (cout, cin, kw, kw), jnp.float32)
        if sn:
            w = spectral_normalize(w)
        if has_bias:
            b = 0.01 * jax.random.normal(bk, (cout,), jnp.float32)
        else:
            b = jnp.zeros((cout,), jnp.float32)

        # Precompute the Pallas GEMM operands once.
        # [Cout, Cin, KH, KW] -> [KH, KW, Cin, Cout] -> [KH*KW*Cin, Cout]
        # (matches im2col ordering: K index = (i*KW + j)*Cin + c).
        K = cin * kw * kw
        Kp, Np = _round_up(K, 128), _round_up(cout, 128)
        wmat = jnp.transpose(w, (2, 3, 1, 0)).reshape(K, cout)
        wmat = jnp.zeros((Kp, Np), jnp.bfloat16).at[:K, :cout].set(
            wmat.astype(jnp.bfloat16))
        brow = jnp.zeros((1, Np), jnp.float32).at[0, :cout].set(b)

        layers.append(dict(w=w, b=b, wmat=wmat, brow=brow, ksize=kw,
                           stride=stride, pad=padw, cout=cout, act=act,
                           alpha=0.1))
    return layers


def nlayer_discriminator_forward(x_nchw, layers):
    """Equivalent of NLayerDiscriminator.forward (getIntermFeat=False)."""
    x = jnp.transpose(x_nchw, (0, 2, 3, 1))   # NCHW -> NHWC
    for layer in layers:
        x = conv2d_act_pallas(x, layer)
    return jnp.transpose(x, (0, 3, 1, 2))     # NHWC -> NCHW


# ---------------------------------------------------------------------------
# Reference (plain JAX) at matching precision: bf16 conv inputs, f32 accum.
# ---------------------------------------------------------------------------
def _ref_forward(x_nchw, layers):
    x = x_nchw
    for layer in layers:
        y = jax.lax.conv_general_dilated(
            x.astype(jnp.bfloat16), layer["w"].astype(jnp.bfloat16),
            (layer["stride"],) * 2, ((layer["pad"],) * 2,) * 2,
            dimension_numbers=("NCHW", "OIHW", "NCHW"),
            preferred_element_type=jnp.float32)
        y = y + layer["b"][None, :, None, None]
        if layer["act"] == "relu":
            y = jnp.maximum(y, 0.0)
        elif layer["act"] == "leaky":
            y = jnp.where(y >= 0.0, y, layer["alpha"] * y)
        x = y
    return x


if __name__ == "__main__":
    key = jax.random.PRNGKey(0)
    key, xk = jax.random.split(key)

    # Small shapes consistent with the module: batch=2, input_nc=4, 16x16 images.
    input_nc = 4
    x = jax.random.normal(xk, (2, input_nc, 16, 16), jnp.float32)

    layers = init_nlayer_discriminator_params(key, input_nc, ndf=64, n_layers=3)

    out = jax.block_until_ready(nlayer_discriminator_forward(x, layers))
    ref = jax.block_until_ready(_ref_forward(x, layers))

    assert out.shape == ref.shape == (2, 1, 5, 5), (out.shape, ref.shape)
    np.testing.assert_allclose(np.asarray(out), np.asarray(ref),
                               rtol=1e-2, atol=1e-3)
    print("KERNEL_OK")
</pallas_src>

<mosaic_0001>
module attributes {stable_mosaic.version = 11 : i64} {
  func.func @_conv_mm_kernel(%arg0: i32, %arg1: i32, %arg2: i32, %arg3: memref<176x128xbf16, #tpu.memory_space<vmem>>, %arg4: memref<128x128xbf16, #tpu.memory_space<vmem>>, %arg5: memref<1x128xf32, #tpu.memory_space<vmem>>, %arg6: memref<176x128xf32, #tpu.memory_space<vmem>>) attributes {dimension_semantics = [#tpu.dimension_semantics<parallel>, #tpu.dimension_semantics<parallel>, #tpu.dimension_semantics<arbitrary>], iteration_bounds = array<i64: 1, 1, 1>, scalar_prefetch = 0 : i64, scratch_operands = 0 : i64, tpu.core_type = #tpu.core_type<tc>, window_params = [{transform_indices = @transform_0, window_bounds = array<i64: 176, 128>}, {transform_indices = @transform_1, window_bounds = array<i64: 128, 128>}, {transform_indices = @transform_2, window_bounds = array<i64: 1, 128>}, {transform_indices = @transform_3, window_bounds = array<i64: 176, 128>}]} {
    %c0_i32 = arith.constant 0 : i32
    %0 = arith.cmpi eq, %arg2, %c0_i32 : i32
    %1 = arith.extui %0 : i1 to i32
    %c0_i32_0 = arith.constant 0 : i32
    %2 = arith.cmpi ne, %1, %c0_i32_0 : i32
    scf.if %2 {
      %cst_10 = arith.constant 0.000000e+00 : f32
      %12 = vector.broadcast %cst_10 : f32 to vector<176x128xf32>
      %c0_11 = arith.constant 0 : index
      %c0_12 = arith.constant 0 : index
      %13 = vector.load %arg6[%c0_11, %c0_12] : memref<176x128xf32, #tpu.memory_space<vmem>>, vector<176x128xf32>
      tpu.vector_store %arg6[%c0_11, %c0_12], %12 {strides = array<i32>} : memref<176x128xf32, #tpu.memory_space<vmem>>, vector<176x128xf32>,
    } else {
    }
    %c0 = arith.constant 0 : index
    %c0_1 = arith.constant 0 : index
    %3 = vector.load %arg6[%c0, %c0_1] : memref<176x128xf32, #tpu.memory_space<vmem>>, vector<176x128xf32>
    %c0_2 = arith.constant 0 : index
    %c0_3 = arith.constant 0 : index
    %4 = vector.load %arg3[%c0_2, %c0_3] : memref<176x128xbf16, #tpu.memory_space<vmem>>, vector<176x128xbf16>
    %c0_4 = arith.constant 0 : index
    %c0_5 = arith.constant 0 : index
    %5 = vector.load %arg4[%c0_4, %c0_5] : memref<128x128xbf16, #tpu.memory_space<vmem>>, vector<128x128xbf16>
    %cst = arith.constant dense<0.000000e+00> : vector<176x128xf32>
    %6 = tpu.matmul %4, %5, %cst {dimension_numbers = #tpu.dot_dimension_numbers<[1], [0], [0], [1], [0, 0, 1, 1], [], []>} : vector<176x128xbf16>, vector<128x128xbf16>, vector<176x128xf32> -> vector<176x128xf32>
    %7 = arith.addf %3, %6 : vector<176x128xf32>
    %c0_6 = arith.constant 0 : index
    %c0_7 = arith.constant 0 : index
    %8 = vector.load %arg6[%c0_6, %c0_7] : memref<176x128xf32, #tpu.memory_space<vmem>>, vector<176x128xf32>
    tpu.vector_store %arg6[%c0_6, %c0_7], %7 {strides = array<i32>} : memref<176x128xf32, #tpu.memory_space<vmem>>, vector<176x128xf32>,
    %c0_i32_8 = arith.constant 0 : i32
    %9 = arith.cmpi eq, %arg2, %c0_i32_8 : i32
    %10 = arith.extui %9 : i1 to i32
    %c0_i32_9 = arith.constant 0 : i32
    %11 = arith.cmpi ne, %10, %c0_i32_9 : i32
    scf.if %11 {
      %c0_10 = arith.constant 0 : index
      %c0_11 = arith.constant 0 : index
      %12 = vector.load %arg6[%c0_10, %c0_11] : memref<176x128xf32, #tpu.memory_space<vmem>>, vector<176x128xf32>
      %c0_12 = arith.constant 0 : index
      %c0_13 = arith.constant 0 : index
      %13 = vector.load %arg5[%c0_12, %c0_13] : memref<1x128xf32, #tpu.memory_space<vmem>>, vector<1x128xf32>
      %14 = vector.broadcast %13 : vector<1x128xf32> to vector<176x128xf32>
      %15 = arith.addf %12, %14 : vector<176x128xf32>
      %cst_14 = arith.constant 0.000000e+00 : f32
      %16 = vector.broadcast %cst_14 : f32 to vector<176x128xf32>
      %17 = arith.maximumf %15, %16 : vector<176x128xf32>
      %c0_15 = arith.constant 0 : index
      %c0_16 = arith.constant 0 : index
      %18 = vector.load %arg6[%c0_15, %c0_16] : memref<176x128xf32, #tpu.memory_space<vmem>>, vector<176x128xf32>
      tpu.vector_store %arg6[%c0_15, %c0_16], %17 {strides = array<i32>} : memref<176x128xf32, #tpu.memory_space<vmem>>, vector<176x128xf32>,
    } else {
    }
    return
  }
  func.func @transform_0(%arg0: i32, %arg1: i32, %arg2: i32) -> (i32, i32) {
    %c0_i32 = arith.constant 0 : i32
    return %arg0, %arg2 : i32, i32
  }
  func.func @transform_1(%arg0: i32, %arg1: i32, %arg2: i32) -> (i32, i32) {
    %c0_i32 = arith.constant 0 : i32
    return %arg2, %arg1 : i32, i32
  }
  func.func @transform_2(%arg0: i32, %arg1: i32, %arg2: i32) -> (i32, i32) {
    %c0_i32 = arith.constant 0 : i32
    %c0_i32_0 = arith.constant 0 : i32
    return %c0_i32, %arg1 : i32, i32
  }
  func.func @transform_3(%arg0: i32, %arg1: i32, %arg2: i32) -> (i32, i32) {
    %c0_i32 = arith.constant 0 : i32
    return %arg0, %arg1 : i32, i32
  }
}

</mosaic_0001>

<llo_original>
// kernel: tpu_custom_call.1
$region0: #{tpu_custom_call.1}
  #allocation0 [shape = 'u32[]', space=smem, size = 0x4, offset = 0x4, fixed_abs, tag = 'smem constant byte address 0x4 - core index']
  #allocation1 [shape = 'u32[72,128]{1,0:T(1,128)}', space=vmem, size = 0x9000, scoped, tag = 'internal scratch']
  %s0 = inlined_call_operand.hbm [shape: bf16[176,128], index: 0, kind: input, shape index: {}]
  %s1 = inlined_call_operand.hbm [shape: bf16[128,128], index: 1, kind: input, shape index: {}]
  %s2 = inlined_call_operand.vmem [shape: f32[1,128], index: 2, kind: input, shape index: {}]
  %s3 = inlined_call_operand.hbm [shape: f32[176,128], index: 3, kind: output, shape index: {}]
  %s4 = sld [smem:[#allocation0]]
  $region38: #{tpu_custom_call.1} parent=0
    _
  %s6 = ssub.s32 1, %s4
  %s7 = scalar_select 0, %s6, %s4
  $region1: #{tpu_custom_call.1} parent=0
    #allocation2 [shape = 'u8[45056]{0}', space=vmem, size = 0xb000, scoped, tag = 'input window, operand 0, single buffered']
    #allocation3 [shape = 's32[1]{0}', space=sflag, size = 0x4, scoped, tag = 'scoped memory for tpu_custom_call.1']
    #allocation4 [shape = 's32[1]{0}', space=sflag, size = 0x4, scoped, tag = 'scoped memory for tpu_custom_call.1']
    #allocation5 [shape = 'u8[32768]{0}', space=vmem, size = 0x8000, scoped, tag = 'input window, operand 1, single buffered']
    #allocation6 [shape = 's32[1]{0}', space=sflag, size = 0x4, scoped, tag = 'scoped memory for tpu_custom_call.1']
    #allocation7 [shape = 'u8[90112]{0}', space=vmem, size = 0x16000, scoped, tag = 'output window, operand 0, single buffered']
    %8 = vsyncpa [#allocation3], 0
    %9 = vsyncpa [#allocation6], 0
    %10 = vsyncpa [#allocation4], 0
    // Predicated region
    $region2: #{tpu_custom_call.1} parent=1 // pred_check
      _
    $region3: #{tpu_custom_call.1} parent=1 // pred_check_branch
      %12 = sbr.rel (0) target = $region5
    $region4: #{tpu_custom_call.1} parent=1 // pred_region
      %14 = vsyncadd [#allocation3], 0
      %s15 = sshll.u32 %s0, 4
      %s16 = int_to_ptr.hbm [resolvable:$true] %s15
      %s17 = sshll.u32 [#allocation2], 4
      %s18 = int_to_ptr.vmem [resolvable:$true] %s17
      %23 = dma.hbm_to_vmem [thread:$0]  %s16, 1408, %s18, [#allocation3], 64, 64, 4
    $region5: #{tpu_custom_call.1} parent=1 // pred_fallthru
      _
    // Predicated region
    $region6: #{tpu_custom_call.1} parent=1 // pred_check
      _
    $region7: #{tpu_custom_call.1} parent=1 // pred_check_branch
      %25 = sbr.rel (0) target = $region9
    $region8: #{tpu_custom_call.1} parent=1 // pred_region
      %27 = vsyncadd [#allocation6], 0
      %s28 = sshll.u32 %s1, 4
      %s29 = int_to_ptr.hbm [resolvable:$true] %s28
      %s30 = sshll.u32 [#allocation5], 4
      %s31 = int_to_ptr.vmem [resolvable:$true] %s30
      %36 = dma.hbm_to_vmem [thread:$0]  %s29, 1024, %s31, [#allocation6], 64, 64, 4
    $region9: #{tpu_custom_call.1} parent=1 // pred_fallthru
      _
    // Predicated region
    $region10: #{tpu_custom_call.1} parent=1 // pred_check
      _
    $region11: #{tpu_custom_call.1} parent=1 // pred_check_branch
      %38 = sbr.rel (0) target = $region13
    $region12: #{tpu_custom_call.1} parent=1 // pred_region
      _
    $region13: #{tpu_custom_call.1} parent=1 // pred_fallthru
      _
    // Predicated region
    $region14: #{tpu_custom_call.1} parent=1 // pred_check
      _
    $region15: #{tpu_custom_call.1} parent=1 // pred_check_branch
      %40 = sbr.rel (0) target = $region17
    $region16: #{tpu_custom_call.1} parent=1 // pred_region
      %42 = dma.done [#allocation3], 1408
    $region17: #{tpu_custom_call.1} parent=1 // pred_fallthru
      _
    // Predicated region
    $region18: #{tpu_custom_call.1} parent=1 // pred_check
      _
    $region19: #{tpu_custom_call.1} parent=1 // pred_check_branch
      %44 = sbr.rel (0) target = $region21
    $region20: #{tpu_custom_call.1} parent=1 // pred_region
      %46 = dma.done [#allocation6], 1024
    $region21: #{tpu_custom_call.1} parent=1 // pred_fallthru
      _
    %p47 = scmp.eq.s32.totalorder 0, 0
    // Predicated region
    $region22: #{tpu_custom_call.1} parent=1 // pred_check
      %p48 = pneg %p47
    $region23: #{tpu_custom_call.1} parent=1 // pred_check_branch
      %50 = sbr.rel (%p48) target = $region25
    $region24: #{tpu_custom_call.1} parent=1 // pred_region
      %51 = vst [vmem:[#allocation7] sm:$0xff] 0.0
      %52 = vst [vmem:[#allocation7 + $0x8] sm:$0xff] 0.0
      %53 = vst [vmem:[#allocation7 + $0x10] sm:$0xff] 0.0
      %54 = vst [vmem:[#allocation7 + $0x18] sm:$0xff] 0.0
      %55 = vst [vmem:[#allocation7 + $0x20] sm:$0xff] 0.0
      %56 = vst [vmem:[#allocation7 + $0x28] sm:$0xff] 0.0
      %57 = vst [vmem:[#allocation7 + $0x30] sm:$0xff] 0.0
      %58 = vst [vmem:[#allocation7 + $0x38] sm:$0xff] 0.0
      %59 = vst [vmem:[#allocation7 + $0x40] sm:$0xff] 0.0
      %60 = vst [vmem:[#allocation7 + $0x48] sm:$0xff] 0.0
      %61 = vst [vmem:[#allocation7 + $0x50] sm:$0xff] 0.0
      %62 = vst [vmem:[#allocation7 + $0x58] sm:$0xff] 0.0
      %63 = vst [vmem:[#allocation7 + $0x60] sm:$0xff] 0.0
      %64 = vst [vmem:[#allocation7 + $0x68] sm:$0xff] 0.0
      %65 = vst [vmem:[#allocation7 + $0x70] sm:$0xff] 0.0
      %66 = vst [vmem:[#allocation7 + $0x78] sm:$0xff] 0.0
      %67 = vst [vmem:[#allocation7 + $0x80] sm:$0xff] 0.0
      %68 = vst [vmem:[#allocation7 + $0x88] sm:$0xff] 0.0
      %69 = vst [vmem:[#allocation7 + $0x90] sm:$0xff] 0.0
      %70 = vst [vmem:[#allocation7 + $0x98] sm:$0xff] 0.0
      %71 = vst [vmem:[#allocation7 + $0xa0] sm:$0xff] 0.0
      %72 = vst [vmem:[#allocation7 + $0xa8] sm:$0xff] 0.0
    $region25: #{tpu_custom_call.1} parent=1 // pred_fallthru
      _
    %v73 = vld [vmem:[#allocation7] sm:$0xff]
    %v74 = vld [vmem:[#allocation7 + $0x8] sm:$0xff]
    %v75 = vld [vmem:[#allocation7 + $0x10] sm:$0xff]
    %v76 = vld [vmem:[#allocation7 + $0x18] sm:$0xff]
    %v77 = vld [vmem:[#allocation7 + $0x20] sm:$0xff]
    %v78 = vld [vmem:[#allocation7 + $0x28] sm:$0xff]
    %v79 = vld [vmem:[#allocation7 + $0x30] sm:$0xff]
    %v80 = vld [vmem:[#allocation7 + $0x38] sm:$0xff]
    %v81 = vld [vmem:[#allocation7 + $0x40] sm:$0xff]
    %v82 = vld [vmem:[#allocation7 + $0x48] sm:$0xff]
    %v83 = vld [vmem:[#allocation7 + $0x50] sm:$0xff]
    %v84 = vld [vmem:[#allocation7 + $0x58] sm:$0xff]
    %v85 = vld [vmem:[#allocation7 + $0x60] sm:$0xff]
    %v86 = vld [vmem:[#allocation7 + $0x68] sm:$0xff]
    %v87 = vld [vmem:[#allocation7 + $0x70] sm:$0xff]
    %v88 = vld [vmem:[#allocation7 + $0x78] sm:$0xff]
    %v89 = vld [vmem:[#allocation7 + $0x80] sm:$0xff]
    %v90 = vld [vmem:[#allocation7 + $0x88] sm:$0xff]
    %v91 = vld [vmem:[#allocation7 + $0x90] sm:$0xff]
    %v92 = vld [vmem:[#allocation7 + $0x98] sm:$0xff]
    %v93 = vld [vmem:[#allocation7 + $0xa0] sm:$0xff]
    %v94 = vld [vmem:[#allocation7 + $0xa8] sm:$0xff]
    %v95 = vld [vmem:[#allocation2] sm:$0xf]
    %v96 = vld [vmem:[#allocation2 + $0x4] sm:$0xf]
    %v97 = vld [vmem:[#allocation2 + $0x8] sm:$0xf]
    %v98 = vld [vmem:[#allocation2 + $0xc] sm:$0xf]
    %v99 = vld [vmem:[#allocation2 + $0x10] sm:$0xf]
    %v100 = vld [vmem:[#allocation2 + $0x14] sm:$0xf]
    %v101 = vld [vmem:[#allocation2 + $0x18] sm:$0xf]
    %v102 = vld [vmem:[#allocation2 + $0x1c] sm:$0xf]
    %v103 = vld [vmem:[#allocation2 + $0x20] sm:$0xf]
    %v104 = vld [vmem:[#allocation2 + $0x24] sm:$0xf]
    %v105 = vld [vmem:[#allocation2 + $0x28] sm:$0xf]
    %v106 = vld [vmem:[#allocation2 + $0x2c] sm:$0xf]
    %v107 = vld [vmem:[#allocation2 + $0x30] sm:$0xf]
    %v108 = vld [vmem:[#allocation2 + $0x34] sm:$0xf]
    %v109 = vld [vmem:[#allocation2 + $0x38] sm:$0xf]
    %v110 = vld [vmem:[#allocation2 + $0x3c] sm:$0xf]
    %v111 = vld [vmem:[#allocation2 + $0x40] sm:$0xf]
    %v112 = vld [vmem:[#allocation2 + $0x44] sm:$0xf]
    %v113 = vld [vmem:[#allocation2 + $0x48] sm:$0xf]
    %v114 = vld [vmem:[#allocation2 + $0x4c] sm:$0xf]
    %v115 = vld [vmem:[#allocation2 + $0x50] sm:$0xf]
    %v116 = vld [vmem:[#allocation2 + $0x54] sm:$0xf]
    %v117 = vld [vmem:[#allocation5] sm:$0xf]
    %v118 = vld [vmem:[#allocation5 + $0x4] sm:$0xf]
    %v119 = vld [vmem:[#allocation5 + $0x8] sm:$0xf]
    %v120 = vld [vmem:[#allocation5 + $0xc] sm:$0xf]
    %v121 = vld [vmem:[#allocation5 + $0x10] sm:$0xf]
    %v122 = vld [vmem:[#allocation5 + $0x14] sm:$0xf]
    %v123 = vld [vmem:[#allocation5 + $0x18] sm:$0xf]
    %v124 = vld [vmem:[#allocation5 + $0x1c] sm:$0xf]
    %v125 = vld [vmem:[#allocation5 + $0x20] sm:$0xf]
    %v126 = vld [vmem:[#allocation5 + $0x24] sm:$0xf]
    %v127 = vld [vmem:[#allocation5 + $0x28] sm:$0xf]
    %v128 = vld [vmem:[#allocation5 + $0x2c] sm:$0xf]
    %v129 = vld [vmem:[#allocation5 + $0x30] sm:$0xf]
    %v130 = vld [vmem:[#allocation5 + $0x34] sm:$0xf]
    %v131 = vld [vmem:[#allocation5 + $0x38] sm:$0xf]
    %v132 = vld [vmem:[#allocation5 + $0x3c] sm:$0xf]
    %v155 = vunpack.c.l.b16 %v95
    %v156 = vunpack.c.l.b16 %v96
    %v157 = vunpack.c.l.b16 %v97
    %v158 = vunpack.c.l.b16 %v98
    %v159 = vunpack.c.l.b16 %v99
    %v160 = vunpack.c.l.b16 %v100
    %v161 = vunpack.c.l.b16 %v101
    %v162 = vunpack.c.l.b16 %v102
    %v163 = vunpack.c.l.b16 %v103
    %v164 = vunpack.c.l.b16 %v104
    %v165 = vunpack.c.l.b16 %v105
    %v166 = vunpack.c.l.b16 %v106
    %v167 = vunpack.c.l.b16 %v107
    %v168 = vunpack.c.l.b16 %v108
    %v169 = vunpack.c.l.b16 %v109
    %v170 = vunpack.c.l.b16 %v110
    %v171 = vunpack.c.l.b16 %v111
    %v172 = vunpack.c.l.b16 %v112
    %v173 = vunpack.c.l.b16 %v113
    %v174 = vunpack.c.l.b16 %v114
    %v175 = vunpack.c.l.b16 %v115
    %v176 = vunpack.c.l.b16 %v116
    %v177 = vpack.c.b16 %v156, %v155
    %v178 = vpack.c.b16 %v158, %v157
    %v179 = vpack.c.b16 %v160, %v159
    %v180 = vpack.c.b16 %v162, %v161
    %v181 = vpack.c.b16 %v164, %v163
    %v182 = vpack.c.b16 %v166, %v165
    %v183 = vpack.c.b16 %v168, %v167
    %v184 = vpack.c.b16 %v170, %v169
    %v185 = vpack.c.b16 %v172, %v171
    %v186 = vpack.c.b16 %v174, %v173
    %v187 = vpack.c.b16 %v176, %v175
    %v215 = vunpack.c.l.b16 %v117
    %v216 = vunpack.c.l.b16 %v118
    %v217 = vunpack.c.l.b16 %v119
    %v218 = vunpack.c.l.b16 %v120
    %v219 = vunpack.c.l.b16 %v121
    %v220 = vunpack.c.l.b16 %v122
    %v221 = vunpack.c.l.b16 %v123
    %v222 = vunpack.c.l.b16 %v124
    %v223 = vunpack.c.l.b16 %v125
    %v224 = vunpack.c.l.b16 %v126
    %v225 = vunpack.c.l.b16 %v127
    %v226 = vunpack.c.l.b16 %v128
    %v227 = vunpack.c.l.b16 %v129
    %v228 = vunpack.c.l.b16 %v130
    %v229 = vunpack.c.l.b16 %v131
    %v230 = vunpack.c.l.b16 %v132
    %v231 = vpack.c.b16 %v216, %v215
    %v232 = vpack.c.b16 %v218, %v217
    %v233 = vpack.c.b16 %v220, %v219
    %v234 = vpack.c.b16 %v222, %v221
    %v235 = vpack.c.b16 %v224, %v223
    %v236 = vpack.c.b16 %v226, %v225
    %v237 = vpack.c.b16 %v228, %v227
    %v238 = vpack.c.b16 %v230, %v229
    %247 = vmatpush.bf16.msra.mxu0 %v238
    %248 = vmatpush.bf16.msra.mxu0 %v237
    %249 = vmatpush.bf16.msra.mxu0 %v236
    %250 = vmatpush.bf16.msra.mxu0 %v235
    %251 = vmatpush.bf16.msra.mxu0 %v234
    %252 = vmatpush.bf16.msra.mxu0 %v233
    %253 = vmatpush.bf16.msra.mxu0 %v232
    %254 = vmatpush.bf16.msra.mxu0 %v231
    %255 = vmatmul.bf16.gmra.mxu0 %v177
    %v256 = vpop.f32.mrf.mxu0
    %v257 = vadd.f32 0.0, %v256
    %v258 = vpop.f32.mrf.mxu0
    %v259 = vadd.f32 0.0, %v258
    %260 = vmatmul.bf16.gmra.mxu0 %v178
    %v261 = vpop.f32.mrf.mxu0
    %v262 = vadd.f32 0.0, %v261
    %v263 = vpop.f32.mrf.mxu0
    %v264 = vadd.f32 0.0, %v263
    %265 = vmatmul.bf16.gmra.mxu0 %v179
    %v266 = vpop.f32.mrf.mxu0
    %v267 = vadd.f32 0.0, %v266
    %v268 = vpop.f32.mrf.mxu0
    %v269 = vadd.f32 0.0, %v268
    %270 = vmatmul.bf16.gmra.mxu0 %v180
    %v271 = vpop.f32.mrf.mxu0
    %v272 = vadd.f32 0.0, %v271
    %v273 = vpop.f32.mrf.mxu0
    %v274 = vadd.f32 0.0, %v273
    %275 = vmatmul.bf16.gmra.mxu0 %v181
    %v276 = vpop.f32.mrf.mxu0
    %v277 = vadd.f32 0.0, %v276
    %v278 = vpop.f32.mrf.mxu0
    %v279 = vadd.f32 0.0, %v278
    %280 = vmatmul.bf16.gmra.mxu0 %v182
    %v281 = vpop.f32.mrf.mxu0
    %v282 = vadd.f32 0.0, %v281
    %v283 = vpop.f32.mrf.mxu0
    %v284 = vadd.f32 0.0, %v283
    %285 = vmatmul.bf16.gmra.mxu0 %v183
    %v286 = vpop.f32.mrf.mxu0
    %v287 = vadd.f32 0.0, %v286
    %v288 = vpop.f32.mrf.mxu0
    %v289 = vadd.f32 0.0, %v288
    %290 = vmatmul.bf16.gmra.mxu0 %v184
    %v291 = vpop.f32.mrf.mxu0
    %v292 = vadd.f32 0.0, %v291
    %v293 = vpop.f32.mrf.mxu0
    %v294 = vadd.f32 0.0, %v293
    %295 = vmatmul.bf16.gmra.mxu0 %v185
    %v296 = vpop.f32.mrf.mxu0
    %v297 = vadd.f32 0.0, %v296
    %v298 = vpop.f32.mrf.mxu0
    %v299 = vadd.f32 0.0, %v298
    %300 = vmatmul.bf16.gmra.mxu0 %v186
    %v301 = vpop.f32.mrf.mxu0
    %v302 = vadd.f32 0.0, %v301
    %v303 = vpop.f32.mrf.mxu0
    %v304 = vadd.f32 0.0, %v303
    %305 = vmatmul.bf16.gmra.mxu0 %v187
    %v306 = vpop.f32.mrf.mxu0
    %v307 = vadd.f32 0.0, %v306
    %v308 = vpop.f32.mrf.mxu0
    %v309 = vadd.f32 0.0, %v308
    %310 = vdwg.mxu0
    %v311 = vadd.f32 %v73, %v257
    %v312 = vadd.f32 %v74, %v259
    %v313 = vadd.f32 %v75, %v262
    %v314 = vadd.f32 %v76, %v264
    %v315 = vadd.f32 %v77, %v267
    %v316 = vadd.f32 %v78, %v269
    %v317 = vadd.f32 %v79, %v272
    %v318 = vadd.f32 %v80, %v274
    %v319 = vadd.f32 %v81, %v277
    %v320 = vadd.f32 %v82, %v279
    %v321 = vadd.f32 %v83, %v282
    %v322 = vadd.f32 %v84, %v284
    %v323 = vadd.f32 %v85, %v287
    %v324 = vadd.f32 %v86, %v289
    %v325 = vadd.f32 %v87, %v292
    %v326 = vadd.f32 %v88, %v294
    %v327 = vadd.f32 %v89, %v297
    %v328 = vadd.f32 %v90, %v299
    %v329 = vadd.f32 %v91, %v302
    %v330 = vadd.f32 %v92, %v304
    %v331 = vadd.f32 %v93, %v307
    %v332 = vadd.f32 %v94, %v309
    %333 = vst [vmem:[#allocation7] sm:$0xff] %v311
    %334 = vst [vmem:[#allocation7 + $0x8] sm:$0xff] %v312
    %335 = vst [vmem:[#allocation7 + $0x10] sm:$0xff] %v313
    %336 = vst [vmem:[#allocation7 + $0x18] sm:$0xff] %v314
    %337 = vst [vmem:[#allocation7 + $0x20] sm:$0xff] %v315
    %338 = vst [vmem:[#allocation7 + $0x28] sm:$0xff] %v316
    %339 = vst [vmem:[#allocation7 + $0x30] sm:$0xff] %v317
    %340 = vst [vmem:[#allocation7 + $0x38] sm:$0xff] %v318
    %341 = vst [vmem:[#allocation7 + $0x40] sm:$0xff] %v319
    %342 = vst [vmem:[#allocation7 + $0x48] sm:$0xff] %v320
    %343 = vst [vmem:[#allocation7 + $0x50] sm:$0xff] %v321
    %344 = vst [vmem:[#allocation7 + $0x58] sm:$0xff] %v322
    %345 = vst [vmem:[#allocation7 + $0x60] sm:$0xff] %v323
    %346 = vst [vmem:[#allocation7 + $0x68] sm:$0xff] %v324
    %347 = vst [vmem:[#allocation7 + $0x70] sm:$0xff] %v325
    %348 = vst [vmem:[#allocation7 + $0x78] sm:$0xff] %v326
    %349 = vst [vmem:[#allocation7 + $0x80] sm:$0xff] %v327
    %350 = vst [vmem:[#allocation7 + $0x88] sm:$0xff] %v328
    %351 = vst [vmem:[#allocation7 + $0x90] sm:$0xff] %v329
    %352 = vst [vmem:[#allocation7 + $0x98] sm:$0xff] %v330
    %353 = vst [vmem:[#allocation7 + $0xa0] sm:$0xff] %v331
    %354 = vst [vmem:[#allocation7 + $0xa8] sm:$0xff] %v332
    // Predicated region
    $region26: #{tpu_custom_call.1} parent=1 // pred_check
      %p355 = pneg %p47
    $region27: #{tpu_custom_call.1} parent=1 // pred_check_branch
      %357 = sbr.rel (%p355) target = $region29
    $region28: #{tpu_custom_call.1} parent=1 // pred_region
      %v358 = vld [vmem:[#allocation7] sm:$0xff]
      %v359 = vld [vmem:[#allocation7 + $0x8] sm:$0xff]
      %v360 = vld [vmem:[#allocation7 + $0x10] sm:$0xff]
      %v361 = vld [vmem:[#allocation7 + $0x18] sm:$0xff]
      %v362 = vld [vmem:[#allocation7 + $0x20] sm:$0xff]
      %v363 = vld [vmem:[#allocation7 + $0x28] sm:$0xff]
      %v364 = vld [vmem:[#allocation7 + $0x30] sm:$0xff]
      %v365 = vld [vmem:[#allocation7 + $0x38] sm:$0xff]
      %v366 = vld [vmem:[#allocation7 + $0x40] sm:$0xff]
      %v367 = vld [vmem:[#allocation7 + $0x48] sm:$0xff]
      %v368 = vld [vmem:[#allocation7 + $0x50] sm:$0xff]
      %v369 = vld [vmem:[#allocation7 + $0x58] sm:$0xff]
      %v370 = vld [vmem:[#allocation7 + $0x60] sm:$0xff]
      %v371 = vld [vmem:[#allocation7 + $0x68] sm:$0xff]
      %v372 = vld [vmem:[#allocation7 + $0x70] sm:$0xff]
      %v373 = vld [vmem:[#allocation7 + $0x78] sm:$0xff]
      %v374 = vld [vmem:[#allocation7 + $0x80] sm:$0xff]
      %v375 = vld [vmem:[#allocation7 + $0x88] sm:$0xff]
      %v376 = vld [vmem:[#allocation7 + $0x90] sm:$0xff]
      %v377 = vld [vmem:[#allocation7 + $0x98] sm:$0xff]
      %v378 = vld [vmem:[#allocation7 + $0xa0] sm:$0xff]
      %v379 = vld [vmem:[#allocation7 + $0xa8] sm:$0xff]
      %v380 = vld [vmem:[%s2] sm:$0x1]
      %v382 = vperm.slane %v380, 0
      %v384 = vadd.f32 %v358, %v382
      %v385 = vadd.f32 %v359, %v382
      %v386 = vadd.f32 %v360, %v382
      %v387 = vadd.f32 %v361, %v382
      %v388 = vadd.f32 %v362, %v382
      %v389 = vadd.f32 %v363, %v382
      %v390 = vadd.f32 %v364, %v382
      %v391 = vadd.f32 %v365, %v382
      %v392 = vadd.f32 %v366, %v382
      %v393 = vadd.f32 %v367, %v382
      %v394 = vadd.f32 %v368, %v382
      %v395 = vadd.f32 %v369, %v382
      %v396 = vadd.f32 %v370, %v382
      %v397 = vadd.f32 %v371, %v382
      %v398 = vadd.f32 %v372, %v382
      %v399 = vadd.f32 %v373, %v382
      %v400 = vadd.f32 %v374, %v382
      %v401 = vadd.f32 %v375, %v382
      %v402 = vadd.f32 %v376, %v382
      %v403 = vadd.f32 %v377, %v382
      %v404 = vadd.f32 %v378, %v382
      %v405 = vadd.f32 %v379, %v382
      %v406 = vmax.f32 %v384, 0.0
      %v407 = vmax.f32 %v385, 0.0
      %v408 = vmax.f32 %v386, 0.0
      %v409 = vmax.f32 %v387, 0.0
      %v410 = vmax.f32 %v388, 0.0
      %v411 = vmax.f32 %v389, 0.0
      %v412 = vmax.f32 %v390, 0.0
      %v413 = vmax.f32 %v391, 0.0
      %v414 = vmax.f32 %v392, 0.0
      %v415 = vmax.f32 %v393, 0.0
      %v416 = vmax.f32 %v394, 0.0
      %v417 = vmax.f32 %v395, 0.0
      %v418 = vmax.f32 %v396, 0.0
      %v419 = vmax.f32 %v397, 0.0
      %v420 = vmax.f32 %v398, 0.0
      %v421 = vmax.f32 %v399, 0.0
      %v422 = vmax.f32 %v400, 0.0
      %v423 = vmax.f32 %v401, 0.0
      %v424 = vmax.f32 %v402, 0.0
      %v425 = vmax.f32 %v403, 0.0
      %v426 = vmax.f32 %v404, 0.0
      %v427 = vmax.f32 %v405, 0.0
      %428 = vst [vmem:[#allocation7] sm:$0xff] %v406
      %429 = vst [vmem:[#allocation7 + $0x8] sm:$0xff] %v407
      %430 = vst [vmem:[#allocation7 + $0x10] sm:$0xff] %v408
      %431 = vst [vmem:[#allocation7 + $0x18] sm:$0xff] %v409
      %432 = vst [vmem:[#allocation7 + $0x20] sm:$0xff] %v410
      %433 = vst [vmem:[#allocation7 + $0x28] sm:$0xff] %v411
      %434 = vst [vmem:[#allocation7 + $0x30] sm:$0xff] %v412
      %435 = vst [vmem:[#allocation7 + $0x38] sm:$0xff] %v413
      %436 = vst [vmem:[#allocation7 + $0x40] sm:$0xff] %v414
      %437 = vst [vmem:[#allocation7 + $0x48] sm:$0xff] %v415
      %438 = vst [vmem:[#allocation7 + $0x50] sm:$0xff] %v416
      %439 = vst [vmem:[#allocation7 + $0x58] sm:$0xff] %v417
      %440 = vst [vmem:[#allocation7 + $0x60] sm:$0xff] %v418
      %441 = vst [vmem:[#allocation7 + $0x68] sm:$0xff] %v419
      %442 = vst [vmem:[#allocation7 + $0x70] sm:$0xff] %v420
      %443 = vst [vmem:[#allocation7 + $0x78] sm:$0xff] %v421
      %444 = vst [vmem:[#allocation7 + $0x80] sm:$0xff] %v422
      %445 = vst [vmem:[#allocation7 + $0x88] sm:$0xff] %v423
      %446 = vst [vmem:[#allocation7 + $0x90] sm:$0xff] %v424
      %447 = vst [vmem:[#allocation7 + $0x98] sm:$0xff] %v425
      %448 = vst [vmem:[#allocation7 + $0xa0] sm:$0xff] %v426
      %449 = vst [vmem:[#allocation7 + $0xa8] sm:$0xff] %v427
    $region29: #{tpu_custom_call.1} parent=1 // pred_fallthru
      _
    // Predicated region
    $region30: #{tpu_custom_call.1} parent=1 // pred_check
      _
    $region31: #{tpu_custom_call.1} parent=1 // pred_check_branch
      %451 = sbr.rel (0) target = $region33
    $region32: #{tpu_custom_call.1} parent=1 // pred_region
      %453 = vsyncadd [#allocation4], 0
      %s454 = sshll.u32 [#allocation7], 4
      %s455 = int_to_ptr.vmem [resolvable:$true] %s454
      %s456 = sshll.u32 %s3, 4
      %s457 = int_to_ptr.hbm [resolvable:$true] %s456
      %462 = dma.vmem_to_hbm [thread:$0]  %s455, 2816, %s457, [#allocation4], 128, 128, 8
    $region33: #{tpu_custom_call.1} parent=1 // pred_fallthru
      _
    // Predicated region
    $region34: #{tpu_custom_call.1} parent=1 // pred_check
      _
    $region35: #{tpu_custom_call.1} parent=1 // pred_check_branch
      %464 = sbr.rel (0) target = $region37
    $region36: #{tpu_custom_call.1} parent=1 // pred_region
      %466 = dma.done [#allocation4], 2816
    $region37: #{tpu_custom_call.1} parent=1 // pred_fallthru
      _
    %467 = vsyncpa [#allocation3], 1
    %468 = vsyncpa [#allocation6], 1
    %469 = vsyncpa [#allocation4], 1

</llo_original>
